<compile_context>
chip_gen: v5e
topology: v5e:2x2
jax: 0.10.0
libtpu: 0.0.40
codegen_flags: <defaults>
</compile_context>

<pallas_src>
import functools

import jax
import jax.numpy as jnp
from jax import lax
from jax.experimental import pallas as pl
from jax.experimental.pallas import tpu as pltpu

ALPHA = 0.8
BETA = 0.2

LANES = 128
SUBLANES = 8
MAX_TILE_ROWS = 4096   # f32: 2 MiB/block; 2 inputs x 2 buffers = 8 MiB, safe
                       # under v5e's 16 MiB scoped-VMEM default (and v6e/v7x).
INNER_UNROLL = 8


def _round_up(v, m):
    return ((v + m - 1) // m) * m


def _tversky_partials_kernel(x_ref, t_ref, xt_ref, sx_ref, st_ref, *,
                             rows, tile_rows, n_inner, needs_mask, unroll):
    o = pl.program_id(0)   # parallel (megacore) axis
    i = pl.program_id(1)   # sequential reduction axis

    @pl.when(i == 0)
    def _():
        xt_ref[...] = jnp.zeros_like(xt_ref)
        sx_ref[...] = jnp.zeros_like(sx_ref)
        st_ref[...] = jnp.zeros_like(st_ref)

    g = tile_rows // SUBLANES
    # Rows of the logical array still covered by this block.  Can be <= 0 for
    # the duplicated block of an odd block count; that block contributes zero.
    valid_rows = rows - (o * n_inner + i) * tile_rows

    def accumulate(masked):
        if masked:
            base_row = lax.broadcasted_iota(jnp.int32, (SUBLANES, 1), 0)

        def body(j, carry):
            xt, sx, st = carry
            r = pl.multiple_of(j * SUBLANES, SUBLANES)
            xg = x_ref[pl.ds(r, SUBLANES), :].astype(jnp.float32)
            tg = t_ref[pl.ds(r, SUBLANES), :].astype(jnp.float32)
            if masked:
                m = base_row < (valid_rows - j * SUBLANES)
                xg = jnp.where(m, xg, 0.0)
                tg = jnp.where(m, tg, 0.0)
            return (xt + xg * tg, sx + xg, st + tg)

        zero = jnp.zeros((SUBLANES, LANES), jnp.float32)
        xt, sx, st = lax.fori_loop(0, g, body, (zero, zero, zero),
                                   unroll=min(unroll, g))
        xt_ref[...] += xt
        sx_ref[...] += sx
        st_ref[...] += st

    if not needs_mask:
        # Grid tiles the rows exactly: never compile the masked path.
        accumulate(masked=False)
    else:
        @pl.when(valid_rows >= tile_rows)
        def _():
            accumulate(masked=False)

        @pl.when(valid_rows < tile_rows)
        def _():
            accumulate(masked=True)


def tversky_loss(inputs, targets, smooth=1.0, alpha=ALPHA, beta=BETA):
    """Matches TverskyLoss.forward: flatten, TP/FP/FN sums, scalar loss."""
    x = jnp.ravel(inputs)   # native dtype; cast to f32 happens in-kernel
    t = jnp.ravel(targets)
    n = x.shape[0]

    # Zero-pad (semantically neutral for all three sums) only when numel is
    # not a multiple of one (8,128) vreg.  Typical C*H*W products take the
    # copy-free path.
    # TODO(synk): a fully zero-copy ragged tail would need 1-D manual DMA;
    # the single pad copy only triggers for misaligned sizes.
    n_pad = _round_up(n, SUBLANES * LANES)
    if n_pad != n:
        x = jnp.pad(x, (0, n_pad - n))
        t = jnp.pad(t, (0, n_pad - n))

    rows = n_pad // LANES                       # always a multiple of 8
    if rows <= MAX_TILE_ROWS:
        tile_rows = rows                        # single block == full extent
    else:
        tile_rows = MAX_TILE_ROWS               # multiple of 32 (dtype-safe)

    total_blocks = pl.cdiv(rows, tile_rows)
    n_outer = 2 if total_blocks >= 2 else 1     # megacore split (v7x)
    n_inner = pl.cdiv(total_blocks, n_outer)
    # Mask is needed iff the grid's row coverage != the array's row count
    # (ragged last block and/or a duplicated block for odd block counts).
    needs_mask = (n_outer * n_inner * tile_rows) != rows

    if n_outer * n_inner == total_blocks:
        def in_map(o, i):
            return (o * n_inner + i, 0)
    else:
        # Odd block count: the extra step re-reads the last block (in-bounds
        # DMA); its contribution is masked to zero inside the kernel.
        def in_map(o, i):
            return (jnp.minimum(o * n_inner + i, total_blocks - 1), 0)

    x2 = x.reshape(rows, LANES)                 # free bitcast-style reshape
    t2 = t.reshape(rows, LANES)

    kernel = functools.partial(
        _tversky_partials_kernel,
        rows=rows, tile_rows=tile_rows, n_inner=n_inner,
        needs_mask=needs_mask, unroll=INNER_UNROLL)

    part_shape = jax.ShapeDtypeStruct((n_outer, SUBLANES, LANES), jnp.float32)
    out_spec = pl.BlockSpec((None, SUBLANES, LANES), lambda o, i: (o, 0, 0))

    bytes_accessed = (x2.size * x2.dtype.itemsize
                      + t2.size * t2.dtype.itemsize
                      + 3 * n_outer * SUBLANES * LANES * 4)

    xt_p, sx_p, st_p = pl.pallas_call(
        kernel,
        out_shape=(part_shape, part_shape, part_shape),
        grid_spec=pltpu.PrefetchScalarGridSpec(
            num_scalar_prefetch=0,
            grid=(n_outer, n_inner),
            in_specs=[
                pl.BlockSpec((tile_rows, LANES), in_map),
                pl.BlockSpec((tile_rows, LANES), in_map),
            ],
            out_specs=[out_spec, out_spec, out_spec],
        ),
        compiler_params=pltpu.CompilerParams(
            dimension_semantics=("parallel", "arbitrary"),
        ),
        cost_estimate=pl.CostEstimate(
            flops=5 * n_pad, transcendentals=0,
            bytes_accessed=bytes_accessed),
    )(x2, t2)

    # Tiny finalize in JAX: combine per-core (8,128) partial slabs.
    tp = jnp.sum(xt_p)
    sx = jnp.sum(sx_p)
    st = jnp.sum(st_p)
    fp = sx - tp    # sum((1 - t) * x)
    fn = st - tp    # sum(t * (1 - x))
    tversky = (tp + smooth) / (tp + alpha * fp + beta * fn + smooth)
    return 1.0 - tversky


def tversky_loss_ref(inputs, targets, smooth=1.0, alpha=ALPHA, beta=BETA):
    x = jnp.ravel(inputs).astype(jnp.float32)
    t = jnp.ravel(targets).astype(jnp.float32)
    tp = jnp.sum(x * t)
    fp = jnp.sum((1.0 - t) * x)
    fn = jnp.sum(t * (1.0 - x))
    return 1.0 - (tp + smooth) / (tp + alpha * fp + beta * fn + smooth)


if __name__ == "__main__":
    key = jax.random.PRNGKey(0)
    k1, k2 = jax.random.split(key)

    # Segmentation-style inputs: probabilities and binary targets, NCHW.
    inputs = jax.random.uniform(k1, (2, 4, 16, 16), dtype=jnp.float32)
    targets = (jax.random.uniform(k2, (2, 4, 16, 16)) > 0.5).astype(jnp.float32)

    loss = jax.block_until_ready(tversky_loss(inputs, targets))
    ref = jax.block_until_ready(tversky_loss_ref(inputs, targets))

    assert jnp.allclose(loss, ref, atol=1e-5, rtol=1e-5), (loss, ref)
    print("KERNEL_OK")
</pallas_src>

<mosaic_0001>
module attributes {stable_mosaic.version = 11 : i64} {
  func.func @_tversky_partials_kernel(%arg0: i32, %arg1: i32, %arg2: memref<16x128xf32, #tpu.memory_space<vmem>>, %arg3: memref<16x128xf32, #tpu.memory_space<vmem>>, %arg4: memref<1x8x128xf32, #tpu.memory_space<vmem>>, %arg5: memref<1x8x128xf32, #tpu.memory_space<vmem>>, %arg6: memref<1x8x128xf32, #tpu.memory_space<vmem>>) attributes {dimension_semantics = [#tpu.dimension_semantics<parallel>, #tpu.dimension_semantics<arbitrary>], iteration_bounds = array<i64: 1, 1>, scalar_prefetch = 0 : i64, scratch_operands = 0 : i64, tpu.core_type = #tpu.core_type<tc>, window_params = [{transform_indices = @transform_0, window_bounds = array<i64: 16, 128>}, {transform_indices = @transform_1, window_bounds = array<i64: 16, 128>}, {transform_indices = @transform_2, window_bounds = array<i64: 1, 8, 128>}, {transform_indices = @transform_3, window_bounds = array<i64: 1, 8, 128>}, {transform_indices = @transform_4, window_bounds = array<i64: 1, 8, 128>}]} {
    %c0_i32 = arith.constant 0 : i32
    %0 = arith.cmpi eq, %arg1, %c0_i32 : i32
    %1 = arith.extui %0 : i1 to i32
    %c0_i32_0 = arith.constant 0 : i32
    %2 = arith.cmpi ne, %1, %c0_i32_0 : i32
    scf.if %2 {
      %cst_24 = arith.constant 0.000000e+00 : f32
      %42 = vector.broadcast %cst_24 : f32 to vector<8x128xf32>
      %c0_25 = arith.constant 0 : index
      %c0_26 = arith.constant 0 : index
      %c0_27 = arith.constant 0 : index
      %43 = vector.load %arg4[%c0_25, %c0_26, %c0_27] : memref<1x8x128xf32, #tpu.memory_space<vmem>>, vector<1x8x128xf32>
      %44 = vector.shape_cast %43 : vector<1x8x128xf32> to vector<8x128xf32>
      %45 = vector.shape_cast %42 : vector<8x128xf32> to vector<1x8x128xf32>
      tpu.vector_store %arg4[%c0_25, %c0_26, %c0_27], %45 {strides = array<i32>} : memref<1x8x128xf32, #tpu.memory_space<vmem>>, vector<1x8x128xf32>,
      %cst_28 = arith.constant 0.000000e+00 : f32
      %46 = vector.broadcast %cst_28 : f32 to vector<8x128xf32>
      %c0_29 = arith.constant 0 : index
      %c0_30 = arith.constant 0 : index
      %c0_31 = arith.constant 0 : index
      %47 = vector.load %arg5[%c0_29, %c0_30, %c0_31] : memref<1x8x128xf32, #tpu.memory_space<vmem>>, vector<1x8x128xf32>
      %48 = vector.shape_cast %47 : vector<1x8x128xf32> to vector<8x128xf32>
      %49 = vector.shape_cast %46 : vector<8x128xf32> to vector<1x8x128xf32>
      tpu.vector_store %arg5[%c0_29, %c0_30, %c0_31], %49 {strides = array<i32>} : memref<1x8x128xf32, #tpu.memory_space<vmem>>, vector<1x8x128xf32>,
      %cst_32 = arith.constant 0.000000e+00 : f32
      %50 = vector.broadcast %cst_32 : f32 to vector<8x128xf32>
      %c0_33 = arith.constant 0 : index
      %c0_34 = arith.constant 0 : index
      %c0_35 = arith.constant 0 : index
      %51 = vector.load %arg6[%c0_33, %c0_34, %c0_35] : memref<1x8x128xf32, #tpu.memory_space<vmem>>, vector<1x8x128xf32>
      %52 = vector.shape_cast %51 : vector<1x8x128xf32> to vector<8x128xf32>
      %53 = vector.shape_cast %50 : vector<8x128xf32> to vector<1x8x128xf32>
      tpu.vector_store %arg6[%c0_33, %c0_34, %c0_35], %53 {strides = array<i32>} : memref<1x8x128xf32, #tpu.memory_space<vmem>>, vector<1x8x128xf32>,
    } else {
    }
    %cst = arith.constant 0.000000e+00 : f32
    %3 = vector.broadcast %cst : f32 to vector<8x128xf32>
    %c0_i32_1 = arith.constant 0 : i32
    %c8_i32 = arith.constant 8 : i32
    %4 = arith.muli %c0_i32_1, %c8_i32 : i32
    %5 = tpu.assume_multiple %4, 8 : i32
    %6 = arith.index_cast %5 : i32 to index
    %c0 = arith.constant 0 : index
    %7 = vector.load %arg2[%6, %c0] : memref<16x128xf32, #tpu.memory_space<vmem>>, vector<8x128xf32>
    %8 = arith.index_cast %5 : i32 to index
    %c0_2 = arith.constant 0 : index
    %9 = vector.load %arg3[%8, %c0_2] : memref<16x128xf32, #tpu.memory_space<vmem>>, vector<8x128xf32>
    %10 = arith.mulf %7, %9 : vector<8x128xf32>
    %11 = arith.addf %3, %10 : vector<8x128xf32>
    %12 = arith.addf %3, %7 : vector<8x128xf32>
    %13 = arith.addf %3, %9 : vector<8x128xf32>
    %c1_i32 = arith.constant 1 : i32
    %c8_i32_3 = arith.constant 8 : i32
    %14 = arith.muli %c1_i32, %c8_i32_3 : i32
    %15 = tpu.assume_multiple %14, 8 : i32
    %16 = arith.index_cast %15 : i32 to index
    %c0_4 = arith.constant 0 : index
    %17 = vector.load %arg2[%16, %c0_4] : memref<16x128xf32, #tpu.memory_space<vmem>>, vector<8x128xf32>
    %18 = arith.index_cast %15 : i32 to index
    %c0_5 = arith.constant 0 : index
    %19 = vector.load %arg3[%18, %c0_5] : memref<16x128xf32, #tpu.memory_space<vmem>>, vector<8x128xf32>
    %20 = arith.mulf %17, %19 : vector<8x128xf32>
    %21 = arith.addf %11, %20 : vector<8x128xf32>
    %22 = arith.addf %12, %17 : vector<8x128xf32>
    %23 = arith.addf %13, %19 : vector<8x128xf32>
    %c2_i32 = arith.constant 2 : i32
    %c0_6 = arith.constant 0 : index
    %c0_7 = arith.constant 0 : index
    %c0_8 = arith.constant 0 : index
    %24 = vector.load %arg4[%c0_6, %c0_7, %c0_8] : memref<1x8x128xf32, #tpu.memory_space<vmem>>, vector<1x8x128xf32>
    %25 = vector.shape_cast %24 : vector<1x8x128xf32> to vector<8x128xf32>
    %26 = arith.addf %25, %21 : vector<8x128xf32>
    %c0_9 = arith.constant 0 : index
    %c0_10 = arith.constant 0 : index
    %c0_11 = arith.constant 0 : index
    %27 = vector.load %arg4[%c0_9, %c0_10, %c0_11] : memref<1x8x128xf32, #tpu.memory_space<vmem>>, vector<1x8x128xf32>
    %28 = vector.shape_cast %27 : vector<1x8x128xf32> to vector<8x128xf32>
    %29 = vector.shape_cast %26 : vector<8x128xf32> to vector<1x8x128xf32>
    tpu.vector_store %arg4[%c0_9, %c0_10, %c0_11], %29 {strides = array<i32>} : memref<1x8x128xf32, #tpu.memory_space<vmem>>, vector<1x8x128xf32>,
    %c0_12 = arith.constant 0 : index
    %c0_13 = arith.constant 0 : index
    %c0_14 = arith.constant 0 : index
    %30 = vector.load %arg5[%c0_12, %c0_13, %c0_14] : memref<1x8x128xf32, #tpu.memory_space<vmem>>, vector<1x8x128xf32>
    %31 = vector.shape_cast %30 : vector<1x8x128xf32> to vector<8x128xf32>
    %32 = arith.addf %31, %22 : vector<8x128xf32>
    %c0_15 = arith.constant 0 : index
    %c0_16 = arith.constant 0 : index
    %c0_17 = arith.constant 0 : index
    %33 = vector.load %arg5[%c0_15, %c0_16, %c0_17] : memref<1x8x128xf32, #tpu.memory_space<vmem>>, vector<1x8x128xf32>
    %34 = vector.shape_cast %33 : vector<1x8x128xf32> to vector<8x128xf32>
    %35 = vector.shape_cast %32 : vector<8x128xf32> to vector<1x8x128xf32>
    tpu.vector_store %arg5[%c0_15, %c0_16, %c0_17], %35 {strides = array<i32>} : memref<1x8x128xf32, #tpu.memory_space<vmem>>, vector<1x8x128xf32>,
    %c0_18 = arith.constant 0 : index
    %c0_19 = arith.constant 0 : index
    %c0_20 = arith.constant 0 : index
    %36 = vector.load %arg6[%c0_18, %c0_19, %c0_20] : memref<1x8x128xf32, #tpu.memory_space<vmem>>, vector<1x8x128xf32>
    %37 = vector.shape_cast %36 : vector<1x8x128xf32> to vector<8x128xf32>
    %38 = arith.addf %37, %23 : vector<8x128xf32>
    %c0_21 = arith.constant 0 : index
    %c0_22 = arith.constant 0 : index
    %c0_23 = arith.constant 0 : index
    %39 = vector.load %arg6[%c0_21, %c0_22, %c0_23] : memref<1x8x128xf32, #tpu.memory_space<vmem>>, vector<1x8x128xf32>
    %40 = vector.shape_cast %39 : vector<1x8x128xf32> to vector<8x128xf32>
    %41 = vector.shape_cast %38 : vector<8x128xf32> to vector<1x8x128xf32>
    tpu.vector_store %arg6[%c0_21, %c0_22, %c0_23], %41 {strides = array<i32>} : memref<1x8x128xf32, #tpu.memory_space<vmem>>, vector<1x8x128xf32>,
    return
  }
  func.func @transform_0(%arg0: i32, %arg1: i32) -> (i32, i32) {
    %c1_i32 = arith.constant 1 : i32
    %0 = arith.muli %arg0, %c1_i32 : i32
    %1 = arith.addi %0, %arg1 : i32
    %c0_i32 = arith.constant 0 : i32
    %c0_i32_0 = arith.constant 0 : i32
    return %1, %c0_i32 : i32, i32
  }
  func.func @transform_1(%arg0: i32, %arg1: i32) -> (i32, i32) {
    %c1_i32 = arith.constant 1 : i32
    %0 = arith.muli %arg0, %c1_i32 : i32
    %1 = arith.addi %0, %arg1 : i32
    %c0_i32 = arith.constant 0 : i32
    %c0_i32_0 = arith.constant 0 : i32
    return %1, %c0_i32 : i32, i32
  }
  func.func @transform_2(%arg0: i32, %arg1: i32) -> (i32, i32, i32) {
    %c0_i32 = arith.constant 0 : i32
    %c0_i32_0 = arith.constant 0 : i32
    %c0_i32_1 = arith.constant 0 : i32
    return %arg0, %c0_i32, %c0_i32_0 : i32, i32, i32
  }
  func.func @transform_3(%arg0: i32, %arg1: i32) -> (i32, i32, i32) {
    %c0_i32 = arith.constant 0 : i32
    %c0_i32_0 = arith.constant 0 : i32
    %c0_i32_1 = arith.constant 0 : i32
    return %arg0, %c0_i32, %c0_i32_0 : i32, i32, i32
  }
  func.func @transform_4(%arg0: i32, %arg1: i32) -> (i32, i32, i32) {
    %c0_i32 = arith.constant 0 : i32
    %c0_i32_0 = arith.constant 0 : i32
    %c0_i32_1 = arith.constant 0 : i32
    return %arg0, %c0_i32, %c0_i32_0 : i32, i32, i32
  }
}

</mosaic_0001>

<llo_original>
// kernel: tpu_custom_call.1
$region0: #{tpu_custom_call.1}
  #allocation0 [shape = 'u32[]', space=smem, size = 0x4, offset = 0x4, fixed_abs, tag = 'smem constant byte address 0x4 - core index']
  #allocation1 [shape = 'u32[72,128]{1,0:T(1,128)}', space=vmem, size = 0x9000, scoped, tag = 'internal scratch']
  %s0 = inlined_call_operand.hbm [shape: f32[16,128], index: 0, kind: input, shape index: {}]
  %s1 = inlined_call_operand.hbm [shape: f32[16,128], index: 1, kind: input, shape index: {}]
  %s2 = inlined_call_operand.hbm [shape: f32[1,8,128], index: 2, kind: output, shape index: {0}]
  %s3 = inlined_call_operand.hbm [shape: f32[1,8,128], index: 3, kind: output, shape index: {1}]
  %s4 = inlined_call_operand.hbm [shape: f32[1,8,128], index: 4, kind: output, shape index: {2}]
  %5 = xla_tuple %s2, %s3, %s4
  %s6 = sld [smem:[#allocation0]]
  $region46: #{tpu_custom_call.1} parent=0
    _
  %s8 = ssub.s32 1, %s6
  %s9 = scalar_select 0, %s8, %s6
  $region1: #{tpu_custom_call.1} parent=0
    #allocation2 [shape = 'u8[8192]{0}', space=vmem, size = 0x2000, scoped, tag = 'input window, operand 0, single buffered']
    #allocation3 [shape = 's32[1]{0}', space=sflag, size = 0x4, scoped, tag = 'scoped memory for tpu_custom_call.1']
    #allocation4 [shape = 's32[1]{0}', space=sflag, size = 0x4, scoped, tag = 'scoped memory for tpu_custom_call.1']
    #allocation5 [shape = 'u8[8192]{0}', space=vmem, size = 0x2000, scoped, tag = 'input window, operand 1, single buffered']
    #allocation6 [shape = 's32[1]{0}', space=sflag, size = 0x4, scoped, tag = 'scoped memory for tpu_custom_call.1']
    #allocation7 [shape = 'u8[4096]{0}', space=vmem, size = 0x1000, scoped, tag = 'output window, operand 0, single buffered']
    #allocation8 [shape = 'u8[4096]{0}', space=vmem, size = 0x1000, scoped, tag = 'output window, operand 1, single buffered']
    #allocation9 [shape = 's32[1]{0}', space=sflag, size = 0x4, scoped, tag = 'scoped memory for tpu_custom_call.1']
    #allocation10 [shape = 'u8[4096]{0}', space=vmem, size = 0x1000, scoped, tag = 'output window, operand 2, single buffered']
    %10 = vsyncpa [#allocation3], 0
    %11 = vsyncpa [#allocation6], 0
    %12 = vsyncpa [#allocation4], 0
    %13 = vsyncpa [#allocation9], 0
    // Predicated region
    $region2: #{tpu_custom_call.1} parent=1 // pred_check
      _
    $region3: #{tpu_custom_call.1} parent=1 // pred_check_branch
      %15 = sbr.rel (0) target = $region5
    $region4: #{tpu_custom_call.1} parent=1 // pred_region
      %s16 = sadd.s32 0, 0
      %s17 = smul.u32 2, %s16
      %19 = vsyncadd [#allocation3], 0
      %s20 = smul.addr %s17, 8
      %s21 = scalar_lea.hbm %s0, %s20
      %s22 = sshll.u32 %s21, 4
      %s23 = int_to_ptr.hbm [resolvable:$true] %s22
      %s24 = sshll.u32 [#allocation2], 4
      %s25 = int_to_ptr.vmem [resolvable:$true] %s24
      %30 = dma.hbm_to_vmem [thread:$0]  %s23, 256, %s25, [#allocation3], 128, 128, 8
    $region5: #{tpu_custom_call.1} parent=1 // pred_fallthru
      _
    // Predicated region
    $region6: #{tpu_custom_call.1} parent=1 // pred_check
      _
    $region7: #{tpu_custom_call.1} parent=1 // pred_check_branch
      %32 = sbr.rel (0) target = $region9
    $region8: #{tpu_custom_call.1} parent=1 // pred_region
      %s33 = sadd.s32 0, 0
      %s34 = smul.u32 2, %s33
      %36 = vsyncadd [#allocation6], 0
      %s37 = smul.addr %s34, 8
      %s38 = scalar_lea.hbm %s1, %s37
      %s39 = sshll.u32 %s38, 4
      %s40 = int_to_ptr.hbm [resolvable:$true] %s39
      %s41 = sshll.u32 [#allocation5], 4
      %s42 = int_to_ptr.vmem [resolvable:$true] %s41
      %47 = dma.hbm_to_vmem [thread:$0]  %s40, 256, %s42, [#allocation6], 128, 128, 8
    $region9: #{tpu_custom_call.1} parent=1 // pred_fallthru
      _
    // Predicated region
    $region10: #{tpu_custom_call.1} parent=1 // pred_check
      _
    $region11: #{tpu_custom_call.1} parent=1 // pred_check_branch
      %49 = sbr.rel (0) target = $region13
    $region12: #{tpu_custom_call.1} parent=1 // pred_region
      %51 = dma.done [#allocation3], 256
    $region13: #{tpu_custom_call.1} parent=1 // pred_fallthru
      _
    // Predicated region
    $region14: #{tpu_custom_call.1} parent=1 // pred_check
      _
    $region15: #{tpu_custom_call.1} parent=1 // pred_check_branch
      %53 = sbr.rel (0) target = $region17
    $region16: #{tpu_custom_call.1} parent=1 // pred_region
      %55 = dma.done [#allocation6], 256
    $region17: #{tpu_custom_call.1} parent=1 // pred_fallthru
      _
    %s56 = sadd.s32 0, 0
    %s57 = smul.u32 2, %s56
    %s58 = sadd.s32 0, 0
    %s59 = smul.u32 2, %s58
    %p60 = scmp.eq.s32.totalorder 0, 0
    // Predicated region
    $region18: #{tpu_custom_call.1} parent=1 // pred_check
      %p61 = pneg %p60
    $region19: #{tpu_custom_call.1} parent=1 // pred_check_branch
      %63 = sbr.rel (%p61) target = $region21
    $region20: #{tpu_custom_call.1} parent=1 // pred_region
      %64 = vst [vmem:[#allocation7] sm:$0xff] 0.0
      %65 = vst [vmem:[#allocation8] sm:$0xff] 0.0
      %66 = vst [vmem:[#allocation10] sm:$0xff] 0.0
    $region21: #{tpu_custom_call.1} parent=1 // pred_fallthru
      _
    %v67 = vld [vmem:[#allocation2] sm:$0xff]
    %v68 = vld [vmem:[#allocation5] sm:$0xff]
    %v69 = vmul.f32 %v67, %v68
    %v70 = vadd.f32 %v69, 0.0
    %v71 = vadd.f32 %v67, 0.0
    %v72 = vadd.f32 %v68, 0.0
    %s73 = scalar_lea.vmem [#allocation2], 8
    %v74 = vld [vmem:[%s73] sm:$0xff]
    %s75 = scalar_lea.vmem [#allocation5], 8
    %v76 = vld [vmem:[%s75] sm:$0xff]
    %v77 = vmul.f32 %v74, %v76
    %v78 = vadd.f32 %v70, %v77
    %v79 = vadd.f32 %v71, %v74
    %v80 = vadd.f32 %v72, %v76
    %v81 = vld [vmem:[#allocation7] sm:$0xff]
    %v82 = vadd.f32 %v81, %v78
    %83 = vst [vmem:[#allocation7] sm:$0xff] %v82
    %v84 = vld [vmem:[#allocation8] sm:$0xff]
    %v85 = vadd.f32 %v84, %v79
    %86 = vst [vmem:[#allocation8] sm:$0xff] %v85
    %v87 = vld [vmem:[#allocation10] sm:$0xff]
    %v88 = vadd.f32 %v87, %v80
    %89 = vst [vmem:[#allocation10] sm:$0xff] %v88
    // Predicated region
    $region22: #{tpu_custom_call.1} parent=1 // pred_check
      _
    $region23: #{tpu_custom_call.1} parent=1 // pred_check_branch
      %91 = sbr.rel (0) target = $region25
    $region24: #{tpu_custom_call.1} parent=1 // pred_region
      %93 = vsyncadd [#allocation4], 0
      %s95 = sshll.u32 [#allocation7], 4
      %s96 = int_to_ptr.vmem [resolvable:$true] %s95
      %s97 = sshll.u32 %s2, 4
      %s98 = int_to_ptr.hbm [resolvable:$true] %s97
      %100 = dma.vmem_to_hbm [thread:$0]  %s96, 128, %s98, [#allocation4]
    $region25: #{tpu_custom_call.1} parent=1 // pred_fallthru
      _
    // Predicated region
    $region26: #{tpu_custom_call.1} parent=1 // pred_check
      _
    $region27: #{tpu_custom_call.1} parent=1 // pred_check_branch
      %102 = sbr.rel (0) target = $region29
    $region28: #{tpu_custom_call.1} parent=1 // pred_region
      %104 = vsyncadd [#allocation9], 0
      %s106 = sshll.u32 [#allocation8], 4
      %s107 = int_to_ptr.vmem [resolvable:$true] %s106
      %s108 = sshll.u32 %s3, 4
      %s109 = int_to_ptr.hbm [resolvable:$true] %s108
      %111 = dma.vmem_to_hbm [thread:$0]  %s107, 128, %s109, [#allocation9]
    $region29: #{tpu_custom_call.1} parent=1 // pred_fallthru
      _
    // Predicated region
    $region30: #{tpu_custom_call.1} parent=1 // pred_check
      _
    $region31: #{tpu_custom_call.1} parent=1 // pred_check_branch
      %113 = sbr.rel (0) target = $region33
    $region32: #{tpu_custom_call.1} parent=1 // pred_region
      %115 = vsyncadd [#allocation9], 0
      %s117 = sshll.u32 [#allocation10], 4
      %s118 = int_to_ptr.vmem [resolvable:$true] %s117
      %s119 = sshll.u32 %s4, 4
      %s120 = int_to_ptr.hbm [resolvable:$true] %s119
      %122 = dma.vmem_to_hbm [thread:$0]  %s118, 128, %s120, [#allocation9]
    $region33: #{tpu_custom_call.1} parent=1 // pred_fallthru
      _
    // Predicated region
    $region34: #{tpu_custom_call.1} parent=1 // pred_check
      _
    $region35: #{tpu_custom_call.1} parent=1 // pred_check_branch
      %124 = sbr.rel (0) target = $region37
    $region36: #{tpu_custom_call.1} parent=1 // pred_region
      %126 = dma.done [#allocation4], 128
    $region37: #{tpu_custom_call.1} parent=1 // pred_fallthru
      _
    // Predicated region
    $region38: #{tpu_custom_call.1} parent=1 // pred_check
      _
    $region39: #{tpu_custom_call.1} parent=1 // pred_check_branch
      %128 = sbr.rel (0) target = $region41
    $region40: #{tpu_custom_call.1} parent=1 // pred_region
      %130 = dma.done [#allocation9], 128
    $region41: #{tpu_custom_call.1} parent=1 // pred_fallthru
      _
    // Predicated region
    $region42: #{tpu_custom_call.1} parent=1 // pred_check
      _
    $region43: #{tpu_custom_call.1} parent=1 // pred_check_branch
      %132 = sbr.rel (0) target = $region45
    $region44: #{tpu_custom_call.1} parent=1 // pred_region
      %134 = dma.done [#allocation9], 128
    $region45: #{tpu_custom_call.1} parent=1 // pred_fallthru
      _
    %135 = vsyncpa [#allocation3], 1
    %136 = vsyncpa [#allocation6], 1
    %137 = vsyncpa [#allocation4], 1
    %138 = vsyncpa [#allocation9], 1

</llo_original>
